<compile_context>
chip_gen: v5e
topology: v5e:2x2
jax: 0.10.0
libtpu: 0.0.40
codegen_flags: <defaults>
</compile_context>

<pallas_src>
import functools

import jax
import jax.numpy as jnp
from jax.experimental import pallas as pl
from jax.experimental.pallas import tpu as pltpu

LANES = 128
ROW_BLOCK_MAX = 2048  # 2048x128xf32 = 1 MiB per input tile


# ---------------------------------------------------------------------------
# Kernel 1: partial sums for the weighted BCE term
# ---------------------------------------------------------------------------
def _bce_sums_kernel(x_ref, t_ref, out_ref, acc_t, acc_pos, acc_neg,
                     *, n_elem, row_block, logits, eps):
    i = pl.program_id(0)

    @pl.when(i == 0)
    def _init():
        acc_t[...] = jnp.zeros_like(acc_t)
        acc_pos[...] = jnp.zeros_like(acc_pos)
        acc_neg[...] = jnp.zeros_like(acc_neg)

    x = x_ref[...].astype(jnp.float32)
    t = t_ref[...].astype(jnp.float32)

    if logits:
        # log(sigmoid(x)) / log(1-sigmoid(x)) via the stable BCE-with-logits form:
        # only 1 exp + 1 log per element (arg of log is in [1, 2] -> no log1p needed).
        sp = jnp.log(1.0 + jnp.exp(-jnp.abs(x)))
        log_p = jnp.minimum(x, 0.0) - sp          # log p
        log_1mp = -jnp.maximum(x, 0.0) - sp       # log(1 - p)
    else:
        p = jnp.clip(x, eps, 1.0 - eps)
        log_p = jnp.log(p)
        log_1mp = jnp.log(1.0 - p)

    # In-kernel tail masking against the global flat index (no mask array in HBM).
    base = i * (row_block * LANES)
    row_i = jax.lax.broadcasted_iota(jnp.int32, (row_block, LANES), 0)
    lane_i = jax.lax.broadcasted_iota(jnp.int32, (row_block, LANES), 1)
    valid = (base + row_i * LANES + lane_i) < n_elem

    zero = jnp.zeros_like(x)
    t_m = jnp.where(valid, t, zero)
    pos = jnp.where(valid, t * log_p, zero)
    neg = jnp.where(valid, (1.0 - t) * log_1mp, zero)

    def fold(v):
        # (row_block, 128) -> (8, 128): layout-neutral reshape + VALU adds only.
        return jnp.sum(v.reshape(row_block // 8, 8, LANES), axis=0)

    acc_t[...] += fold(t_m)
    acc_pos[...] += fold(pos)
    acc_neg[...] += fold(neg)

    @pl.when(i == pl.num_programs(0) - 1)
    def _finalize():
        out_ref[0, 0] = jnp.sum(acc_t[...])     # N_pos
        out_ref[0, 1] = jnp.sum(acc_pos[...])   # sum t * log p
        out_ref[0, 2] = jnp.sum(acc_neg[...])   # sum (1-t) * log(1-p)


def _bce_partial_sums(x, target, *, eps, logits):
    n = x.size
    rows = -(-n // LANES)
    rows = -(-rows // 16) * 16                    # sublane-safe for f32 and bf16
    row_block = min(ROW_BLOCK_MAX, rows)
    rows_padded = -(-rows // row_block) * row_block
    padded = rows_padded * LANES

    xf = jnp.ravel(x)
    tf = jnp.ravel(target)
    if padded != n:                               # pad value is irrelevant (iota mask)
        xf = jnp.pad(xf, (0, padded - n))
        tf = jnp.pad(tf, (0, padded - n))
    x2 = xf.reshape(rows_padded, LANES)
    t2 = tf.reshape(rows_padded, LANES)

    kernel = functools.partial(
        _bce_sums_kernel, n_elem=n, row_block=row_block,
        logits=bool(logits), eps=float(eps))

    sums = pl.pallas_call(
        kernel,
        out_shape=jax.ShapeDtypeStruct((1, 3), jnp.float32),
        grid_spec=pltpu.PrefetchScalarGridSpec(
            num_scalar_prefetch=0,
            grid=(rows_padded // row_block,),
            in_specs=[
                pl.BlockSpec((row_block, LANES), lambda i: (i, 0)),
                pl.BlockSpec((row_block, LANES), lambda i: (i, 0)),
            ],
            out_specs=pl.BlockSpec(memory_space=pltpu.SMEM),
            scratch_shapes=[pltpu.VMEM((8, LANES), jnp.float32)] * 3,
        ),
        compiler_params=pltpu.CompilerParams(
            dimension_semantics=("arbitrary",)),   # reduction axis, resident scratch
    )(x2, t2)
    return sums


# ---------------------------------------------------------------------------
# Kernel 2: SmoothLoss = mean(|conv2d(x, [[-1,-1,-1],[-1,8,-1],[-1,-1,-1]]/8, pad=1)|)
# ---------------------------------------------------------------------------
def _smooth_kernel(xp_ref, sum_ref, *, h, w):
    b = pl.program_id(0)

    @pl.when(b == 0)
    def _init():
        sum_ref[0, 0] = jnp.float32(0.0)

    xp = xp_ref[0].astype(jnp.float32)            # (h+2, w+2), zero-padded border
    parts = [xp[di:di + h, dj:dj + w] for di in range(3) for dj in range(3)]
    s = parts[0]
    for p_ in parts[1:]:
        s = s + p_                                # 3x3 box sum (includes center)
    center = xp[1:1 + h, 1:1 + w]
    lap = (9.0 * center - s) * 0.125              # == 8*c - (neighbors), all /8
    sum_ref[0, 0] += jnp.sum(jnp.abs(lap))


def _smooth_abs_sum(x):
    B, C, H, W = x.shape
    imgs = x.reshape(B * C, H, W)
    xp = jnp.pad(imgs, ((0, 0), (1, 1), (1, 1)))  # the conv's padding=1

    out = pl.pallas_call(
        functools.partial(_smooth_kernel, h=H, w=W),
        out_shape=jax.ShapeDtypeStruct((1, 1), jnp.float32),
        grid_spec=pltpu.PrefetchScalarGridSpec(
            num_scalar_prefetch=0,
            grid=(B * C,),
            in_specs=[pl.BlockSpec((1, H + 2, W + 2), lambda b: (b, 0, 0))],
            out_specs=pl.BlockSpec(memory_space=pltpu.SMEM),
        ),
        compiler_params=pltpu.CompilerParams(
            dimension_semantics=("arbitrary",)),
    )(xp)
    return out[0, 0]


# ---------------------------------------------------------------------------
# WeightedSegLoss.forward
# ---------------------------------------------------------------------------
def weighted_seg_loss(x, target, smooth=1.0, eps=1e-6, logits=True):
    assert x.shape == target.shape
    B, C, H, W = x.shape
    # SmoothLoss uses a (1,1,3,3) conv weight, so the PyTorch module requires C == 1.
    assert C == 1, "WeightedSegLoss's SmoothLoss requires single-channel input"

    n_total = jnp.float32(x.size)

    sums = _bce_partial_sums(x, target, eps=eps, logits=logits)
    n_pos = sums[0, 0]
    s_pos = sums[0, 1]     # sum t * log p
    s_neg = sums[0, 2]     # sum (1-t) * log(1-p)

    w_pos = jnp.where(n_pos > 0, 0.5 * n_total / n_pos, jnp.float32(0.5))
    w_neg = 1.0 / (2.0 - 1.0 / w_pos)
    loss_bce = -(w_pos * s_pos + w_neg * s_neg) / n_total   # mean(-log_pt)

    loss_smooth = _smooth_abs_sum(x) / n_total              # conv output numel == numel(x)

    return (loss_bce + smooth * loss_smooth).astype(jnp.float32)


# ---------------------------------------------------------------------------
# Pure-JAX reference mirroring the PyTorch module
# ---------------------------------------------------------------------------
def _reference(x, target, smooth=1.0, eps=1e-6, logits=True):
    x32 = x.astype(jnp.float32)
    t = target.astype(jnp.float32)
    p = jax.nn.sigmoid(x32) if logits else jnp.clip(x32, eps, 1.0 - eps)
    n_total = jnp.float32(t.size)
    n_pos = jnp.sum(t)
    w_pos = jnp.where(n_pos > 0, 0.5 * n_total / n_pos, jnp.float32(0.5))
    w_neg = 1.0 / (2.0 - 1.0 / w_pos)
    log_pt = w_pos * t * jnp.log(p) + w_neg * (1.0 - t) * jnp.log(1.0 - p)
    loss_bce = jnp.mean(-log_pt)

    k = (jnp.array([[-1, -1, -1], [-1, 8, -1], [-1, -1, -1]], jnp.float32) / 8.0
         ).reshape(1, 1, 3, 3)
    conv = jax.lax.conv_general_dilated(
        x32, k, window_strides=(1, 1), padding=((1, 1), (1, 1)),
        dimension_numbers=("NCHW", "OIHW", "NCHW"),
        precision=jax.lax.Precision.HIGHEST)
    loss_smooth = jnp.mean(jnp.abs(conv))
    return loss_bce + smooth * loss_smooth


if __name__ == "__main__":
    key = jax.random.PRNGKey(0)
    k1, k2 = jax.random.split(key)
    # NCHW with C=1 (required by the module's (1,1,3,3) smoothing conv)
    x = jax.random.normal(k1, (2, 1, 16, 16), dtype=jnp.float32)
    target = (jax.random.uniform(k2, (2, 1, 16, 16)) > 0.5).astype(jnp.float32)

    out = weighted_seg_loss(x, target, smooth=1.0)
    out = jax.block_until_ready(out)

    ref = _reference(x, target, smooth=1.0)
    assert jnp.allclose(out, ref, rtol=2e-5, atol=1e-6), (out, ref)
    print("KERNEL_OK")
</pallas_src>

<mosaic_0001>
module attributes {stable_mosaic.version = 11 : i64} {
  func.func @_bce_sums_kernel(%arg0: i32, %arg1: memref<16x128xf32, #tpu.memory_space<vmem>>, %arg2: memref<16x128xf32, #tpu.memory_space<vmem>>, %arg3: memref<1x3xf32, #tpu.memory_space<smem>>, %arg4: memref<8x128xf32, #tpu.memory_space<vmem>>, %arg5: memref<8x128xf32, #tpu.memory_space<vmem>>, %arg6: memref<8x128xf32, #tpu.memory_space<vmem>>) attributes {dimension_semantics = [#tpu.dimension_semantics<arbitrary>], iteration_bounds = array<i64: 1>, scalar_prefetch = 0 : i64, scratch_operands = 3 : i64, tpu.core_type = #tpu.core_type<tc>, window_params = [{transform_indices = @transform_0, window_bounds = array<i64: 16, 128>}, {transform_indices = @transform_1, window_bounds = array<i64: 16, 128>}, {transform_indices = @transform_2, window_bounds = array<i64: 1, 3>}]} {
    %c0_i32 = arith.constant 0 : i32
    %0 = arith.cmpi eq, %arg0, %c0_i32 : i32
    %1 = arith.extui %0 : i1 to i32
    %c0_i32_0 = arith.constant 0 : i32
    %2 = arith.cmpi ne, %1, %c0_i32_0 : i32
    scf.if %2 {
      %cst_27 = arith.constant 0.000000e+00 : f32
      %56 = vector.broadcast %cst_27 : f32 to vector<8x128xf32>
      %c0_28 = arith.constant 0 : index
      %c0_29 = arith.constant 0 : index
      %57 = vector.load %arg4[%c0_28, %c0_29] : memref<8x128xf32, #tpu.memory_space<vmem>>, vector<8x128xf32>
      tpu.vector_store %arg4[%c0_28, %c0_29], %56 {strides = array<i32>} : memref<8x128xf32, #tpu.memory_space<vmem>>, vector<8x128xf32>,
      %cst_30 = arith.constant 0.000000e+00 : f32
      %58 = vector.broadcast %cst_30 : f32 to vector<8x128xf32>
      %c0_31 = arith.constant 0 : index
      %c0_32 = arith.constant 0 : index
      %59 = vector.load %arg5[%c0_31, %c0_32] : memref<8x128xf32, #tpu.memory_space<vmem>>, vector<8x128xf32>
      tpu.vector_store %arg5[%c0_31, %c0_32], %58 {strides = array<i32>} : memref<8x128xf32, #tpu.memory_space<vmem>>, vector<8x128xf32>,
      %cst_33 = arith.constant 0.000000e+00 : f32
      %60 = vector.broadcast %cst_33 : f32 to vector<8x128xf32>
      %c0_34 = arith.constant 0 : index
      %c0_35 = arith.constant 0 : index
      %61 = vector.load %arg6[%c0_34, %c0_35] : memref<8x128xf32, #tpu.memory_space<vmem>>, vector<8x128xf32>
      tpu.vector_store %arg6[%c0_34, %c0_35], %60 {strides = array<i32>} : memref<8x128xf32, #tpu.memory_space<vmem>>, vector<8x128xf32>,
    } else {
    }
    %c0 = arith.constant 0 : index
    %c0_1 = arith.constant 0 : index
    %3 = vector.load %arg1[%c0, %c0_1] : memref<16x128xf32, #tpu.memory_space<vmem>>, vector<16x128xf32>
    %c0_2 = arith.constant 0 : index
    %c0_3 = arith.constant 0 : index
    %4 = vector.load %arg2[%c0_2, %c0_3] : memref<16x128xf32, #tpu.memory_space<vmem>>, vector<16x128xf32>
    %5 = math.absf %3 : vector<16x128xf32>
    %cst = arith.constant 0.000000e+00 : f32
    %6 = vector.broadcast %cst : f32 to vector<16x128xf32>
    %7 = arith.subf %6, %5 : vector<16x128xf32>
    %8 = math.exp %7 : vector<16x128xf32>
    %cst_4 = arith.constant 1.000000e+00 : f32
    %9 = vector.broadcast %cst_4 : f32 to vector<16x128xf32>
    %10 = arith.addf %9, %8 : vector<16x128xf32>
    %11 = math.log %10 : vector<16x128xf32>
    %cst_5 = arith.constant 0.000000e+00 : f32
    %12 = vector.broadcast %cst_5 : f32 to vector<16x128xf32>
    %13 = arith.minimumf %3, %12 : vector<16x128xf32>
    %14 = arith.subf %13, %11 : vector<16x128xf32>
    %cst_6 = arith.constant 0.000000e+00 : f32
    %15 = vector.broadcast %cst_6 : f32 to vector<16x128xf32>
    %16 = arith.maximumf %3, %15 : vector<16x128xf32>
    %cst_7 = arith.constant 0.000000e+00 : f32
    %17 = vector.broadcast %cst_7 : f32 to vector<16x128xf32>
    %18 = arith.subf %17, %16 : vector<16x128xf32>
    %19 = arith.subf %18, %11 : vector<16x128xf32>
    %c2048_i32 = arith.constant 2048 : i32
    %20 = arith.muli %arg0, %c2048_i32 : i32
    %21 = tpu.iota {dimensions = array<i32: 0>} : vector<16x128xi32>
    %22 = tpu.iota {dimensions = array<i32: 1>} : vector<16x128xi32>
    %c128_i32 = arith.constant 128 : i32
    %23 = vector.broadcast %c128_i32 : i32 to vector<16x128xi32>
    %24 = arith.muli %21, %23 : vector<16x128xi32>
    %25 = vector.broadcast %20 : i32 to vector<16x128xi32>
    %26 = arith.addi %25, %24 : vector<16x128xi32>
    %27 = arith.addi %26, %22 : vector<16x128xi32>
    %c512_i32 = arith.constant 512 : i32
    %28 = vector.broadcast %c512_i32 : i32 to vector<16x128xi32>
    %29 = arith.cmpi slt, %27, %28 : vector<16x128xi32>
    %cst_8 = arith.constant 0.000000e+00 : f32
    %30 = vector.broadcast %cst_8 : f32 to vector<16x128xf32>
    %31 = arith.select %29, %4, %30 : vector<16x128xi1>, vector<16x128xf32>
    %32 = arith.mulf %4, %14 : vector<16x128xf32>
    %33 = arith.select %29, %32, %30 : vector<16x128xi1>, vector<16x128xf32>
    %cst_9 = arith.constant 1.000000e+00 : f32
    %34 = vector.broadcast %cst_9 : f32 to vector<16x128xf32>
    %35 = arith.subf %34, %4 : vector<16x128xf32>
    %36 = arith.mulf %35, %19 : vector<16x128xf32>
    %37 = arith.select %29, %36, %30 : vector<16x128xi1>, vector<16x128xf32>
    %c0_10 = arith.constant 0 : index
    %c0_11 = arith.constant 0 : index
    %38 = vector.load %arg4[%c0_10, %c0_11] : memref<8x128xf32, #tpu.memory_space<vmem>>, vector<8x128xf32>
    %39 = vector.shape_cast %31 : vector<16x128xf32> to vector<2x8x128xf32>
    %cst_12 = arith.constant dense<0.000000e+00> : vector<8x128xf32>
    %40 = vector.multi_reduction <add>, %39, %cst_12 [0] : vector<2x8x128xf32> to vector<8x128xf32>
    %41 = arith.addf %38, %40 : vector<8x128xf32>
    %c0_13 = arith.constant 0 : index
    %c0_14 = arith.constant 0 : index
    %42 = vector.load %arg4[%c0_13, %c0_14] : memref<8x128xf32, #tpu.memory_space<vmem>>, vector<8x128xf32>
    tpu.vector_store %arg4[%c0_13, %c0_14], %41 {strides = array<i32>} : memref<8x128xf32, #tpu.memory_space<vmem>>, vector<8x128xf32>,
    %c0_15 = arith.constant 0 : index
    %c0_16 = arith.constant 0 : index
    %43 = vector.load %arg5[%c0_15, %c0_16] : memref<8x128xf32, #tpu.memory_space<vmem>>, vector<8x128xf32>
    %44 = vector.shape_cast %33 : vector<16x128xf32> to vector<2x8x128xf32>
    %cst_17 = arith.constant dense<0.000000e+00> : vector<8x128xf32>
    %45 = vector.multi_reduction <add>, %44, %cst_17 [0] : vector<2x8x128xf32> to vector<8x128xf32>
    %46 = arith.addf %43, %45 : vector<8x128xf32>
    %c0_18 = arith.constant 0 : index
    %c0_19 = arith.constant 0 : index
    %47 = vector.load %arg5[%c0_18, %c0_19] : memref<8x128xf32, #tpu.memory_space<vmem>>, vector<8x128xf32>
    tpu.vector_store %arg5[%c0_18, %c0_19], %46 {strides = array<i32>} : memref<8x128xf32, #tpu.memory_space<vmem>>, vector<8x128xf32>,
    %c0_20 = arith.constant 0 : index
    %c0_21 = arith.constant 0 : index
    %48 = vector.load %arg6[%c0_20, %c0_21] : memref<8x128xf32, #tpu.memory_space<vmem>>, vector<8x128xf32>
    %49 = vector.shape_cast %37 : vector<16x128xf32> to vector<2x8x128xf32>
    %cst_22 = arith.constant dense<0.000000e+00> : vector<8x128xf32>
    %50 = vector.multi_reduction <add>, %49, %cst_22 [0] : vector<2x8x128xf32> to vector<8x128xf32>
    %51 = arith.addf %48, %50 : vector<8x128xf32>
    %c0_23 = arith.constant 0 : index
    %c0_24 = arith.constant 0 : index
    %52 = vector.load %arg6[%c0_23, %c0_24] : memref<8x128xf32, #tpu.memory_space<vmem>>, vector<8x128xf32>
    tpu.vector_store %arg6[%c0_23, %c0_24], %51 {strides = array<i32>} : memref<8x128xf32, #tpu.memory_space<vmem>>, vector<8x128xf32>,
    %c0_i32_25 = arith.constant 0 : i32
    %53 = arith.cmpi eq, %arg0, %c0_i32_25 : i32
    %54 = arith.extui %53 : i1 to i32
    %c0_i32_26 = arith.constant 0 : i32
    %55 = arith.cmpi ne, %54, %c0_i32_26 : i32
    scf.if %55 {
      %c0_27 = arith.constant 0 : index
      %c0_28 = arith.constant 0 : index
      %56 = vector.load %arg4[%c0_27, %c0_28] : memref<8x128xf32, #tpu.memory_space<vmem>>, vector<8x128xf32>
      %57 = vector.shape_cast %56 : vector<8x128xf32> to vector<1x8x128xf32>
      %cst_29 = arith.constant dense<0.000000e+00> : vector<1xf32>
      %58 = vector.multi_reduction <add>, %57, %cst_29 [1, 2] : vector<1x8x128xf32> to vector<1xf32>
      %59 = vector.shape_cast %58 : vector<1xf32> to vector<1x1x1xf32>
      %60 = vector.extract %59[0, 0, 0] : f32 from vector<1x1x1xf32>
      %c0_30 = arith.constant 0 : index
      %c0_31 = arith.constant 0 : index
      %61 = memref.load %arg3[%c0_30, %c0_31] : memref<1x3xf32, #tpu.memory_space<smem>>
      memref.store %60, %arg3[%c0_30, %c0_31] : memref<1x3xf32, #tpu.memory_space<smem>>
      %c0_32 = arith.constant 0 : index
      %c0_33 = arith.constant 0 : index
      %62 = vector.load %arg5[%c0_32, %c0_33] : memref<8x128xf32, #tpu.memory_space<vmem>>, vector<8x128xf32>
      %63 = vector.shape_cast %62 : vector<8x128xf32> to vector<1x8x128xf32>
      %cst_34 = arith.constant dense<0.000000e+00> : vector<1xf32>
      %64 = vector.multi_reduction <add>, %63, %cst_34 [1, 2] : vector<1x8x128xf32> to vector<1xf32>
      %65 = vector.shape_cast %64 : vector<1xf32> to vector<1x1x1xf32>
      %66 = vector.extract %65[0, 0, 0] : f32 from vector<1x1x1xf32>
      %c0_35 = arith.constant 0 : index
      %c1 = arith.constant 1 : index
      %67 = memref.load %arg3[%c0_35, %c1] : memref<1x3xf32, #tpu.memory_space<smem>>
      memref.store %66, %arg3[%c0_35, %c1] : memref<1x3xf32, #tpu.memory_space<smem>>
      %c0_36 = arith.constant 0 : index
      %c0_37 = arith.constant 0 : index
      %68 = vector.load %arg6[%c0_36, %c0_37] : memref<8x128xf32, #tpu.memory_space<vmem>>, vector<8x128xf32>
      %69 = vector.shape_cast %68 : vector<8x128xf32> to vector<1x8x128xf32>
      %cst_38 = arith.constant dense<0.000000e+00> : vector<1xf32>
      %70 = vector.multi_reduction <add>, %69, %cst_38 [1, 2] : vector<1x8x128xf32> to vector<1xf32>
      %71 = vector.shape_cast %70 : vector<1xf32> to vector<1x1x1xf32>
      %72 = vector.extract %71[0, 0, 0] : f32 from vector<1x1x1xf32>
      %c0_39 = arith.constant 0 : index
      %c2 = arith.constant 2 : index
      %73 = memref.load %arg3[%c0_39, %c2] : memref<1x3xf32, #tpu.memory_space<smem>>
      memref.store %72, %arg3[%c0_39, %c2] : memref<1x3xf32, #tpu.memory_space<smem>>
    } else {
    }
    return
  }
  func.func @transform_0(%arg0: i32) -> (i32, i32) {
    %c0_i32 = arith.constant 0 : i32
    %c0_i32_0 = arith.constant 0 : i32
    return %arg0, %c0_i32 : i32, i32
  }
  func.func @transform_1(%arg0: i32) -> (i32, i32) {
    %c0_i32 = arith.constant 0 : i32
    %c0_i32_0 = arith.constant 0 : i32
    return %arg0, %c0_i32 : i32, i32
  }
  func.func @transform_2(%arg0: i32) -> (i32, i32) {
    %c0_i32 = arith.constant 0 : i32
    %c0_i32_0 = arith.constant 0 : i32
    %c0_i32_1 = arith.constant 0 : i32
    return %c0_i32, %c0_i32_0 : i32, i32
  }
}

</mosaic_0001>

<llo_original>
// kernel: tpu_custom_call.1
$region0: #{tpu_custom_call.1}
  #allocation0 [shape = 'u32[]', space=smem, size = 0x4, offset = 0x4, fixed_abs, tag = 'smem constant byte address 0x4 - core index']
  #allocation1 [shape = 'u32[72,128]{1,0:T(1,128)}', space=vmem, size = 0x9000, scoped, tag = 'internal scratch']
  #allocation2 [shape = 'f32[8,128]{1,0:T(8,128)}', space=vmem, size = 0x1000, scoped, tag = 'scratch operand']
  #allocation3 [shape = 'f32[8,128]{1,0:T(8,128)}', space=vmem, size = 0x1000, scoped, tag = 'scratch operand']
  #allocation4 [shape = 'f32[8,128]{1,0:T(8,128)}', space=vmem, size = 0x1000, scoped, tag = 'scratch operand']
  %s0 = inlined_call_operand.hbm [shape: f32[16,128], index: 0, kind: input, shape index: {}]
  %s1 = inlined_call_operand.hbm [shape: f32[16,128], index: 1, kind: input, shape index: {}]
  %s2 = inlined_call_operand.hbm [shape: f32[1,3], index: 2, kind: output, shape index: {}]
  %s3 = sld [smem:[#allocation0]]
  $region34: #{tpu_custom_call.1} parent=0
    _
  %s5 = ssub.s32 1, %s3
  %s6 = scalar_select 0, %s5, %s3
  $region1: #{tpu_custom_call.1} parent=0
    #allocation5 [shape = 'u8[8192]{0}', space=vmem, size = 0x2000, scoped, tag = 'input window, operand 0, single buffered']
    #allocation6 [shape = 's32[1]{0}', space=sflag, size = 0x4, scoped, tag = 'scoped memory for tpu_custom_call.1']
    #allocation7 [shape = 's32[1]{0}', space=sflag, size = 0x4, scoped, tag = 'scoped memory for tpu_custom_call.1']
    #allocation8 [shape = 'u8[8192]{0}', space=vmem, size = 0x2000, scoped, tag = 'input window, operand 1, single buffered']
    #allocation9 [shape = 's32[1]{0}', space=sflag, size = 0x4, scoped, tag = 'scoped memory for tpu_custom_call.1']
    #allocation10 [shape = 'u8[512]{0}', space=smem, size = 0x200, scoped, tag = 'output window, operand 0, single buffered']
    %7 = vsyncpa [#allocation6], 0
    %8 = vsyncpa [#allocation9], 0
    %9 = vsyncpa [#allocation7], 0
    // Predicated region
    $region2: #{tpu_custom_call.1} parent=1 // pred_check
      _
    $region3: #{tpu_custom_call.1} parent=1 // pred_check_branch
      %11 = sbr.rel (0) target = $region5
    $region4: #{tpu_custom_call.1} parent=1 // pred_region
      %13 = vsyncadd [#allocation6], 0
      %s14 = sshll.u32 %s0, 4
      %s15 = int_to_ptr.hbm [resolvable:$true] %s14
      %s16 = sshll.u32 [#allocation5], 4
      %s17 = int_to_ptr.vmem [resolvable:$true] %s16
      %22 = dma.hbm_to_vmem [thread:$0]  %s15, 256, %s17, [#allocation6], 128, 128, 8
    $region5: #{tpu_custom_call.1} parent=1 // pred_fallthru
      _
    // Predicated region
    $region6: #{tpu_custom_call.1} parent=1 // pred_check
      _
    $region7: #{tpu_custom_call.1} parent=1 // pred_check_branch
      %24 = sbr.rel (0) target = $region9
    $region8: #{tpu_custom_call.1} parent=1 // pred_region
      %26 = vsyncadd [#allocation9], 0
      %s27 = sshll.u32 %s1, 4
      %s28 = int_to_ptr.hbm [resolvable:$true] %s27
      %s29 = sshll.u32 [#allocation8], 4
      %s30 = int_to_ptr.vmem [resolvable:$true] %s29
      %35 = dma.hbm_to_vmem [thread:$0]  %s28, 256, %s30, [#allocation9], 128, 128, 8
    $region9: #{tpu_custom_call.1} parent=1 // pred_fallthru
      _
    // Predicated region
    $region10: #{tpu_custom_call.1} parent=1 // pred_check
      _
    $region11: #{tpu_custom_call.1} parent=1 // pred_check_branch
      %37 = sbr.rel (0) target = $region13
    $region12: #{tpu_custom_call.1} parent=1 // pred_region
      %39 = dma.done [#allocation6], 256
    $region13: #{tpu_custom_call.1} parent=1 // pred_fallthru
      _
    // Predicated region
    $region14: #{tpu_custom_call.1} parent=1 // pred_check
      _
    $region15: #{tpu_custom_call.1} parent=1 // pred_check_branch
      %41 = sbr.rel (0) target = $region17
    $region16: #{tpu_custom_call.1} parent=1 // pred_region
      %43 = dma.done [#allocation9], 256
    $region17: #{tpu_custom_call.1} parent=1 // pred_fallthru
      _
    %p44 = scmp.eq.s32.totalorder 0, 0
    // Predicated region
    $region18: #{tpu_custom_call.1} parent=1 // pred_check
      %p45 = pneg %p44
    $region19: #{tpu_custom_call.1} parent=1 // pred_check_branch
      %47 = sbr.rel (%p45) target = $region21
    $region20: #{tpu_custom_call.1} parent=1 // pred_region
      %48 = vst [vmem:[#allocation2] sm:$0xff] 0.0
      %49 = vst [vmem:[#allocation3] sm:$0xff] 0.0
      %50 = vst [vmem:[#allocation4] sm:$0xff] 0.0
    $region21: #{tpu_custom_call.1} parent=1 // pred_fallthru
      _
    %v51 = vld [vmem:[#allocation5] sm:$0xff]
    %v52 = vld [vmem:[#allocation5 + $0x8] sm:$0xff]
    %v53 = vld [vmem:[#allocation8] sm:$0xff]
    %v54 = vld [vmem:[#allocation8 + $0x8] sm:$0xff]
    %v55 = vand.u32 2147483647, %v51
    %v56 = vand.u32 2147483647, %v52
    %v57 = vsub.f32 0.0, %v55
    %v58 = vsub.f32 0.0, %v56
    %v59 = vmul.f32 %v57, 1.442695
    %v60 = vpow.pop %v59
    %v61 = vmul.f32 %v58, 1.442695
    %v62 = vpow.pop %v61
    %v63 = vadd.f32 %v60, 1.0
    %v64 = vadd.f32 %v62, 1.0
    %v65 = vlog2.pop %v63
    %v66 = vmul.f32 %v65, 0.6931472
    %v67 = vlog2.pop %v64
    %v68 = vmul.f32 %v67, 0.6931472
    %v69 = vmin.f32 %v51, 0.0
    %v70 = vmin.f32 %v52, 0.0
    %v71 = vsub.f32 %v69, %v66
    %v72 = vsub.f32 %v70, %v68
    %v73 = vmax.f32 %v51, 0.0
    %v74 = vmax.f32 %v52, 0.0
    %v75 = vsub.f32 0.0, %v73
    %v76 = vsub.f32 0.0, %v74
    %v77 = vsub.f32 %v75, %v66
    %v78 = vsub.f32 %v76, %v68
    %s79 = smul.u32 0, 2048
    %v80 = vlaneseq
    %v81 = vshrl.u32 %v80, 7
    %v82 = vadd.s32 %v81, 8
    %v83 = vlaneseq
    %v84 = vand.u32 %v83, 127
    %v85 = vmul.u32 %v81, 128
    %v86 = vmul.u32 %v82, 128
    %v87 = vstv %s79
    %v88 = vadd.s32 %v87, %v85
    %v89 = vadd.s32 %v87, %v86
    %v90 = vadd.s32 %v88, %v84
    %v91 = vadd.s32 %v89, %v84
    %vm92 = vcmp.lt.s32.totalorder %v90, 512
    %vm93 = vcmp.lt.s32.totalorder %v91, 512
    %v94 = vsel %vm92, %v53, 0.0
    %v95 = vsel %vm93, %v54, 0.0
    %v96 = vmul.f32 %v53, %v71
    %v97 = vmul.f32 %v54, %v72
    %v98 = vsel %vm92, %v96, 0.0
    %v99 = vsel %vm93, %v97, 0.0
    %v100 = vsub.f32 1.0, %v53
    %v101 = vsub.f32 1.0, %v54
    %v102 = vmul.f32 %v100, %v77
    %v103 = vmul.f32 %v101, %v78
    %v104 = vsel %vm92, %v102, 0.0
    %v105 = vsel %vm93, %v103, 0.0
    %v106 = vld [vmem:[#allocation2] sm:$0xff]
    %v107 = vadd.f32 %v94, %v95
    %v108 = vadd.f32 %v106, %v107
    %109 = vst [vmem:[#allocation2] sm:$0xff] %v108
    %v110 = vld [vmem:[#allocation3] sm:$0xff]
    %v111 = vadd.f32 %v98, %v99
    %v112 = vadd.f32 %v110, %v111
    %113 = vst [vmem:[#allocation3] sm:$0xff] %v112
    %v114 = vld [vmem:[#allocation4] sm:$0xff]
    %v115 = vadd.f32 %v104, %v105
    %v116 = vadd.f32 %v114, %v115
    %117 = vst [vmem:[#allocation4] sm:$0xff] %v116
    // Predicated region
    $region22: #{tpu_custom_call.1} parent=1 // pred_check
      %p118 = pneg %p44
    $region23: #{tpu_custom_call.1} parent=1 // pred_check_branch
      %120 = sbr.rel (%p118) target = $region25
    $region24: #{tpu_custom_call.1} parent=1 // pred_region
      %v121 = vld [vmem:[#allocation2] sm:$0xff]
      %122 = vadd.xlane.f32.xlu0 %v121
      %v123 = vpop.xlane.xlu0 %122
      %v124 = vrot.slane %v123, 4
      %v125 = vadd.f32 %v123, %v124
      %v126 = vrot.slane %v125, 2
      %v127 = vadd.f32 %v125, %v126
      %v128 = vrot.slane %v127, 1
      %v129 = vadd.f32 %v127, %v128
      %s130 = vtos %v129
      %s131 = scalar_lea.smem [#allocation10], 0
      %132 = sst [smem:[%s131]] %s130
      %v133 = vld [vmem:[#allocation3] sm:$0xff]
      %134 = vadd.xlane.f32.xlu0 %v133
      %v135 = vpop.xlane.xlu0 %134
      %v136 = vrot.slane %v135, 4
      %v137 = vadd.f32 %v135, %v136
      %v138 = vrot.slane %v137, 2
      %v139 = vadd.f32 %v137, %v138
      %v140 = vrot.slane %v139, 1
      %v141 = vadd.f32 %v139, %v140
      %s142 = vtos %v141
      %s143 = scalar_lea.smem [#allocation10], 1
      %144 = sst [smem:[%s143]] %s142
      %v145 = vld [vmem:[#allocation4] sm:$0xff]
      %146 = vadd.xlane.f32.xlu0 %v145
      %v147 = vpop.xlane.xlu0 %146
      %v148 = vrot.slane %v147, 4
      %v149 = vadd.f32 %v147, %v148
      %v150 = vrot.slane %v149, 2
      %v151 = vadd.f32 %v149, %v150
      %v152 = vrot.slane %v151, 1
      %v153 = vadd.f32 %v151, %v152
      %s154 = vtos %v153
      %s155 = scalar_lea.smem [#allocation10], 2
      %156 = sst [smem:[%s155]] %s154
    $region25: #{tpu_custom_call.1} parent=1 // pred_fallthru
      _
    // Predicated region
    $region26: #{tpu_custom_call.1} parent=1 // pred_check
      _
    $region27: #{tpu_custom_call.1} parent=1 // pred_check_branch
      %158 = sbr.rel (0) target = $region29
    $region28: #{tpu_custom_call.1} parent=1 // pred_region
      %160 = vsyncadd [#allocation7], 0
      %s162 = sshll.u32 %s2, 4
      %s163 = int_to_ptr.hbm [resolvable:$true] %s162
      %165 = dma.smem_to_hbm [#allocation10], 16, %s163, [#allocation7]
    $region29: #{tpu_custom_call.1} parent=1 // pred_fallthru
      _
    // Predicated region
    $region30: #{tpu_custom_call.1} parent=1 // pred_check
      _
    $region31: #{tpu_custom_call.1} parent=1 // pred_check_branch
      %167 = sbr.rel (0) target = $region33
    $region32: #{tpu_custom_call.1} parent=1 // pred_region
      %169 = dma.done [#allocation7], 16
    $region33: #{tpu_custom_call.1} parent=1 // pred_fallthru
      _
    %170 = sfence
    %171 = vsyncpa [#allocation6], 1
    %172 = vsyncpa [#allocation9], 1
    %173 = vsyncpa [#allocation7], 1

</llo_original>
